<compile_context>
chip_gen: v6e
topology: v6e:2x2x1
jax: 0.10.0
libtpu: 0.0.40
codegen_flags: <defaults>
</compile_context>

<pallas_src>
import jax
import jax.numpy as jnp
from jax import lax
from jax.experimental import pallas as pl
from jax.experimental.pallas import tpu as pltpu


# ---- synthetic "args" / feature config (deterministic, in-script) -----------
EMBEDDING_SIZE = 32
ONE_HOT_FEAT = ["item_id", "user_id", "category", "city"]
DENSE_FEAT = ["dense_0", "dense_1", "dense_2"]
NUM_WORDS_DICT = {"item_id": 64, "user_id": 48, "category": 16, "city": 8}


# ---- Pallas kernel: fused multi-table embedding gather ----------------------
def _fused_embed_kernel(ids_ref, *refs):
    """ids_ref: [B, F] int32 (VMEM). refs = (*table_refs, out_ref).

    table_refs[f]: [V_f, E] f32, whole table resident in VMEM.
    out_ref:       [B, F*E] f32, lane-dense concatenated embeddings.
    """
    *table_refs, out_ref = refs
    ids = ids_ref[...]                                   # [B, F] int32 in vregs
    B = ids.shape[0]

    embs = []
    for f, table_ref in enumerate(table_refs):
        table = table_ref[...]                           # [V_f, E]
        V = table.shape[0]
        ids_col = ids[:, f:f + 1]                        # [B, 1], static lane slice
        # one-hot(ids) @ table  ==  table[ids]  (OOB ids -> zero row, safe)
        onehot = (ids_col == lax.broadcasted_iota(jnp.int32, (B, V), 1))
        onehot = onehot.astype(table.dtype)              # [B, V]
        embs.append(
            jnp.dot(onehot, table, preferred_element_type=jnp.float32)
        )                                                # [B, E]

    # single unmasked lane-dense store: [B, F*E] == [8, 128] here
    out_ref[...] = jnp.concatenate(embs, axis=-1).astype(out_ref.dtype)


def fused_embedding_lookup(tables, x_sparse):
    """Returns [B, F*E] with out[:, f*E:(f+1)*E] = tables[f][x_sparse[:, f], :]."""
    B, F = x_sparse.shape
    assert F == len(tables)
    E = tables[0].shape[1]
    vmem = pl.BlockSpec(memory_space=pltpu.MemorySpace.VMEM)
    return pl.pallas_call(
        _fused_embed_kernel,
        out_shape=jax.ShapeDtypeStruct((B, F * E), jnp.float32),
        in_specs=[vmem] * (1 + F),   # ids + F tables, all whole-array in VMEM
        out_specs=vmem,
    )(x_sparse, *tables)


# ---- JAX port of BaseRecModel ------------------------------------------------
class BaseRecModel:
    def __init__(self, key, embedding_size=EMBEDDING_SIZE):
        self.embedding_size = embedding_size
        self.one_hot_feat = ONE_HOT_FEAT
        self.dense_feat = DENSE_FEAT
        self.embeddings = {}
        for col in self.one_hot_feat:
            key, sub = jax.random.split(key)
            # matches nn.init.normal_(weight, mean=0, std=1/embedding_size)
            self.embeddings[col] = jax.random.normal(
                sub, (NUM_WORDS_DICT[col], embedding_size), dtype=jnp.float32
            ) * (1.0 / embedding_size)

    def forward_with_embs(self, x_sparse, x_dense, item_id_emb):
        # TODO(synk): abstract in the PyTorch base class (raises NotImplementedError);
        # the base model defines no head, so pass the gathered embedding through.
        return item_id_emb

    def forward(self, x_sparse, x_dense):
        # One fused Pallas call gathers all feature embeddings into a lane-dense
        # [B, F*E] slab; item_id's embedding is its first E columns, which is
        # exactly embeddings['item_id'](x_sparse[:, 0]) from the PyTorch model.
        all_embs = fused_embedding_lookup(
            [self.embeddings[c] for c in self.one_hot_feat], x_sparse
        )
        item_id_emb = all_embs[:, : self.embedding_size]
        return self.forward_with_embs(x_sparse, x_dense, item_id_emb)

    def __call__(self, x_sparse, x_dense):
        return self.forward(x_sparse, x_dense)


# ---- driver ------------------------------------------------------------------
if __name__ == "__main__":
    key = jax.random.PRNGKey(0)
    k_model, k_sparse, k_dense = jax.random.split(key, 3)

    model = BaseRecModel(k_model)

    B = 8
    F = len(ONE_HOT_FEAT)
    # sparse int ids: column f drawn from [0, vocab_f)
    cols = []
    ks = jax.random.split(k_sparse, F)
    for f, col in enumerate(ONE_HOT_FEAT):
        cols.append(
            jax.random.randint(ks[f], (B,), 0, NUM_WORDS_DICT[col], dtype=jnp.int32)
        )
    x_sparse = jnp.stack(cols, axis=1)                       # [B, F] int32
    x_dense = jax.random.normal(k_dense, (B, len(DENSE_FEAT)), dtype=jnp.float32)

    out = model(x_sparse, x_dense)
    out = jax.block_until_ready(out)

    # correctness: forward output == embeddings['item_id'][x_sparse[:, 0]]
    ref_item = model.embeddings["item_id"][x_sparse[:, 0]]
    assert out.shape == (B, EMBEDDING_SIZE), out.shape
    assert jnp.allclose(out, ref_item, atol=1e-6), "item_id gather mismatch"

    # correctness of the full fused slab vs plain-JAX per-table gathers
    fused = jax.block_until_ready(
        fused_embedding_lookup(
            [model.embeddings[c] for c in ONE_HOT_FEAT], x_sparse
        )
    )
    ref_fused = jnp.concatenate(
        [model.embeddings[c][x_sparse[:, f]] for f, c in enumerate(ONE_HOT_FEAT)],
        axis=1,
    )
    assert fused.shape == (B, F * EMBEDDING_SIZE), fused.shape
    assert jnp.allclose(fused, ref_fused, atol=1e-6), "fused gather mismatch"

    print("KERNEL_OK")
</pallas_src>

<mosaic_0001>
module attributes {stable_mosaic.version = 11 : i64} {
  func.func @_fused_embed_kernel(%arg0: memref<8x4xi32, #tpu.memory_space<vmem>>, %arg1: memref<64x32xf32, #tpu.memory_space<vmem>>, %arg2: memref<48x32xf32, #tpu.memory_space<vmem>>, %arg3: memref<16x32xf32, #tpu.memory_space<vmem>>, %arg4: memref<8x32xf32, #tpu.memory_space<vmem>>, %arg5: memref<8x128xf32, #tpu.memory_space<vmem>>) attributes {dimension_semantics = [], scalar_prefetch = 0 : i64, scratch_operands = 0 : i64, tpu.core_type = #tpu.core_type<tc>} {
    %c0 = arith.constant 0 : index
    %c0_0 = arith.constant 0 : index
    %0 = vector.load %arg0[%c0, %c0_0] : memref<8x4xi32, #tpu.memory_space<vmem>>, vector<8x4xi32>
    %c0_1 = arith.constant 0 : index
    %c0_2 = arith.constant 0 : index
    %1 = vector.load %arg1[%c0_1, %c0_2] : memref<64x32xf32, #tpu.memory_space<vmem>>, vector<64x32xf32>
    %2 = vector.extract_strided_slice %0 {offsets = [0, 0], sizes = [8, 1], strides = [1, 1]} : vector<8x4xi32> to vector<8x1xi32>
    %3 = tpu.iota {dimensions = array<i32: 1>} : vector<8x64xi32>
    %4 = vector.broadcast %2 : vector<8x1xi32> to vector<8x64xi32>
    %5 = arith.cmpi eq, %4, %3 : vector<8x64xi32>
    %6 = arith.extui %5 : vector<8x64xi1> to vector<8x64xi32>
    %7 = arith.sitofp %6 : vector<8x64xi32> to vector<8x64xf32>
    %cst = arith.constant dense<0.000000e+00> : vector<8x32xf32>
    %8 = tpu.matmul %7, %1, %cst {dimension_numbers = #tpu.dot_dimension_numbers<[1], [0], [0], [1], [0, 0, 1, 1], [], []>} : vector<8x64xf32>, vector<64x32xf32>, vector<8x32xf32> -> vector<8x32xf32>
    %c0_3 = arith.constant 0 : index
    %c0_4 = arith.constant 0 : index
    %9 = vector.load %arg2[%c0_3, %c0_4] : memref<48x32xf32, #tpu.memory_space<vmem>>, vector<48x32xf32>
    %10 = vector.extract_strided_slice %0 {offsets = [0, 1], sizes = [8, 1], strides = [1, 1]} : vector<8x4xi32> to vector<8x1xi32>
    %11 = tpu.iota {dimensions = array<i32: 1>} : vector<8x48xi32>
    %12 = vector.broadcast %10 : vector<8x1xi32> to vector<8x48xi32>
    %13 = arith.cmpi eq, %12, %11 : vector<8x48xi32>
    %14 = arith.extui %13 : vector<8x48xi1> to vector<8x48xi32>
    %15 = arith.sitofp %14 : vector<8x48xi32> to vector<8x48xf32>
    %cst_5 = arith.constant dense<0.000000e+00> : vector<8x32xf32>
    %16 = tpu.matmul %15, %9, %cst_5 {dimension_numbers = #tpu.dot_dimension_numbers<[1], [0], [0], [1], [0, 0, 1, 1], [], []>} : vector<8x48xf32>, vector<48x32xf32>, vector<8x32xf32> -> vector<8x32xf32>
    %c0_6 = arith.constant 0 : index
    %c0_7 = arith.constant 0 : index
    %17 = vector.load %arg3[%c0_6, %c0_7] : memref<16x32xf32, #tpu.memory_space<vmem>>, vector<16x32xf32>
    %18 = vector.extract_strided_slice %0 {offsets = [0, 2], sizes = [8, 1], strides = [1, 1]} : vector<8x4xi32> to vector<8x1xi32>
    %19 = tpu.iota {dimensions = array<i32: 1>} : vector<8x16xi32>
    %20 = vector.broadcast %18 : vector<8x1xi32> to vector<8x16xi32>
    %21 = arith.cmpi eq, %20, %19 : vector<8x16xi32>
    %22 = arith.extui %21 : vector<8x16xi1> to vector<8x16xi32>
    %23 = arith.sitofp %22 : vector<8x16xi32> to vector<8x16xf32>
    %cst_8 = arith.constant dense<0.000000e+00> : vector<8x32xf32>
    %24 = tpu.matmul %23, %17, %cst_8 {dimension_numbers = #tpu.dot_dimension_numbers<[1], [0], [0], [1], [0, 0, 1, 1], [], []>} : vector<8x16xf32>, vector<16x32xf32>, vector<8x32xf32> -> vector<8x32xf32>
    %c0_9 = arith.constant 0 : index
    %c0_10 = arith.constant 0 : index
    %25 = vector.load %arg4[%c0_9, %c0_10] : memref<8x32xf32, #tpu.memory_space<vmem>>, vector<8x32xf32>
    %26 = vector.extract_strided_slice %0 {offsets = [0, 3], sizes = [8, 1], strides = [1, 1]} : vector<8x4xi32> to vector<8x1xi32>
    %27 = tpu.iota {dimensions = array<i32: 1>} : vector<8x8xi32>
    %28 = vector.broadcast %26 : vector<8x1xi32> to vector<8x8xi32>
    %29 = arith.cmpi eq, %28, %27 : vector<8x8xi32>
    %30 = arith.extui %29 : vector<8x8xi1> to vector<8x8xi32>
    %31 = arith.sitofp %30 : vector<8x8xi32> to vector<8x8xf32>
    %cst_11 = arith.constant dense<0.000000e+00> : vector<8x32xf32>
    %32 = tpu.matmul %31, %25, %cst_11 {dimension_numbers = #tpu.dot_dimension_numbers<[1], [0], [0], [1], [0, 0, 1, 1], [], []>} : vector<8x8xf32>, vector<8x32xf32>, vector<8x32xf32> -> vector<8x32xf32>
    %33 = tpu.concatenate %8, %16, %24, %32 in 1 : vector<8x32xf32>, vector<8x32xf32>, vector<8x32xf32>, vector<8x32xf32> -> vector<8x128xf32>
    %c0_12 = arith.constant 0 : index
    %c0_13 = arith.constant 0 : index
    %34 = vector.load %arg5[%c0_12, %c0_13] : memref<8x128xf32, #tpu.memory_space<vmem>>, vector<8x128xf32>
    tpu.vector_store %arg5[%c0_12, %c0_13], %33 {strides = array<i32>} : memref<8x128xf32, #tpu.memory_space<vmem>>, vector<8x128xf32>,
    return
  }
}

</mosaic_0001>

<llo_original>
// kernel: tpu_custom_call.1
$region0: #{tpu_custom_call.1}
  #allocation0 [shape = 'u32[]', space=smem, size = 0x4, offset = 0x4, fixed_abs, tag = 'smem constant byte address 0x4 - core index']
  #allocation1 [shape = 'u32[144,128]{1,0:T(1,128)}', space=vmem, size = 0x12000, scoped, tag = 'internal scratch']
  %s0 = inlined_call_operand.vmem [shape: s32[8,4], index: 0, kind: input, shape index: {}]
  %s1 = inlined_call_operand.vmem [shape: f32[64,32], index: 1, kind: input, shape index: {}]
  %s2 = inlined_call_operand.vmem [shape: f32[48,32], index: 2, kind: input, shape index: {}]
  %s3 = inlined_call_operand.vmem [shape: f32[16,32], index: 3, kind: input, shape index: {}]
  %s4 = inlined_call_operand.vmem [shape: f32[8,32], index: 4, kind: input, shape index: {}]
  %s5 = inlined_call_operand.hbm [shape: f32[8,128], index: 5, kind: output, shape index: {}]
  %s6 = sld [smem:[#allocation0]]
  $region30: #{tpu_custom_call.1} parent=0
    _
  %s8 = ssub.s32 1, %s6
  %s9 = scalar_select 0, %s8, %s6
  $region1: #{tpu_custom_call.1} parent=0
    #allocation2 [shape = 'u8[4096]{0}', space=vmem, size = 0x1000, scoped, tag = 'output window, operand 0, single buffered']
    #allocation3 [shape = 's32[1]{0}', space=sflag, size = 0x4, scoped, tag = 'scoped memory for tpu_custom_call.1']
    %10 = vsyncpa [#allocation3], 0
    // Predicated region
    $region2: #{tpu_custom_call.1} parent=1 // pred_check
      _
    $region3: #{tpu_custom_call.1} parent=1 // pred_check_branch
      %12 = sbr.rel (0) target = $region5
    $region4: #{tpu_custom_call.1} parent=1 // pred_region
      _
    $region5: #{tpu_custom_call.1} parent=1 // pred_fallthru
      _
    // Predicated region
    $region6: #{tpu_custom_call.1} parent=1 // pred_check
      _
    $region7: #{tpu_custom_call.1} parent=1 // pred_check_branch
      %14 = sbr.rel (0) target = $region9
    $region8: #{tpu_custom_call.1} parent=1 // pred_region
      _
    $region9: #{tpu_custom_call.1} parent=1 // pred_fallthru
      _
    // Predicated region
    $region10: #{tpu_custom_call.1} parent=1 // pred_check
      _
    $region11: #{tpu_custom_call.1} parent=1 // pred_check_branch
      %16 = sbr.rel (0) target = $region13
    $region12: #{tpu_custom_call.1} parent=1 // pred_region
      _
    $region13: #{tpu_custom_call.1} parent=1 // pred_fallthru
      _
    // Predicated region
    $region14: #{tpu_custom_call.1} parent=1 // pred_check
      _
    $region15: #{tpu_custom_call.1} parent=1 // pred_check_branch
      %18 = sbr.rel (0) target = $region17
    $region16: #{tpu_custom_call.1} parent=1 // pred_region
      _
    $region17: #{tpu_custom_call.1} parent=1 // pred_fallthru
      _
    // Predicated region
    $region18: #{tpu_custom_call.1} parent=1 // pred_check
      _
    $region19: #{tpu_custom_call.1} parent=1 // pred_check_branch
      %20 = sbr.rel (0) target = $region21
    $region20: #{tpu_custom_call.1} parent=1 // pred_region
      _
    $region21: #{tpu_custom_call.1} parent=1 // pred_fallthru
      _
    %v21 = vld [vmem:[%s0] sm:$0xff]
    %v22 = vld [vmem:[%s1] sm:$0xff]
    %v23 = vld [vmem:[%s1 + $0x8] sm:$0xff]
    %v24 = vld [vmem:[%s1 + $0x10] sm:$0xff]
    %v25 = vld [vmem:[%s1 + $0x18] sm:$0xff]
    %v26 = vld [vmem:[%s1 + $0x20] sm:$0xff]
    %v27 = vld [vmem:[%s1 + $0x28] sm:$0xff]
    %v28 = vld [vmem:[%s1 + $0x30] sm:$0xff]
    %v29 = vld [vmem:[%s1 + $0x38] sm:$0xff]
    %v30 = vlaneseq
    %v31 = vand.u32 %v30, 127
    %32 = vset.pattern.permute.xlu0 0
    %33 = vperm.xlu0 %32, %v21
    %v34 = vpop.permute.xlu0 %33
    %vm35 = vcmp.eq.s32.totalorder %v34, %v31
    %v36 = vsel %vm35, 1, 0
    %v37 = vcvt.s32.f32 %v36
    %vm38 = vcmask 523264
    %v40 = vsel %vm38, %v37, 0
    %42 = vmatprep.subr.mxu0 0.0
    %43 = vmatpush1.msra.mxu0 0.0
    %44 = vmatprep.subr.mxu0 0.0
    %45 = vmatpush1.msra.mxu0 0.0
    %46 = vmatprep.subr.mxu0 0.0
    %47 = vmatpush1.msra.mxu0 0.0
    %48 = vmatprep.subr.mxu0 0.0
    %49 = vmatpush1.msra.mxu0 0.0
    %50 = vmatprep.subr.mxu0 0.0
    %51 = vmatpush1.msra.mxu0 0.0
    %52 = vmatprep.subr.mxu0 0.0
    %53 = vmatpush1.msra.mxu0 0.0
    %54 = vmatprep.subr.mxu0 0.0
    %55 = vmatpush1.msra.mxu0 0.0
    %56 = vmatprep.subr.mxu0 0.0
    %57 = vmatpush1.msra.mxu0 0.0
    %58 = vmatprep.subr.mxu0 0.0
    %59 = vmatpush1.msra.mxu0 %v29
    %60 = vmatprep.subr.mxu0 0.0
    %61 = vmatpush1.msra.mxu0 %v28
    %62 = vmatprep.subr.mxu0 0.0
    %63 = vmatpush1.msra.mxu0 %v27
    %64 = vmatprep.subr.mxu0 0.0
    %65 = vmatpush1.msra.mxu0 %v26
    %66 = vmatprep.subr.mxu0 0.0
    %67 = vmatpush1.msra.mxu0 %v25
    %68 = vmatprep.subr.mxu0 0.0
    %69 = vmatpush1.msra.mxu0 %v24
    %70 = vmatprep.subr.mxu0 0.0
    %71 = vmatpush1.msra.mxu0 %v23
    %72 = vmatprep.subr.mxu0 0.0
    %73 = vmatpush1.msra.mxu0 %v22
    %74 = vmatprep.subr.mxu0 0.0
    %75 = vmatpush2.msra.mxu0 0.0
    %76 = vmatprep.subr.mxu0 0.0
    %77 = vmatpush2.msra.mxu0 0.0
    %78 = vmatprep.subr.mxu0 0.0
    %79 = vmatpush2.msra.mxu0 0.0
    %80 = vmatprep.subr.mxu0 0.0
    %81 = vmatpush2.msra.mxu0 0.0
    %82 = vmatprep.subr.mxu0 0.0
    %83 = vmatpush2.msra.mxu0 0.0
    %84 = vmatprep.subr.mxu0 0.0
    %85 = vmatpush2.msra.mxu0 0.0
    %86 = vmatprep.subr.mxu0 0.0
    %87 = vmatpush2.msra.mxu0 0.0
    %88 = vmatprep.subr.mxu0 0.0
    %89 = vmatpush2.msra.mxu0 0.0
    %90 = vmatprep.subr.mxu0 0.0
    %91 = vmatpush2.msra.mxu0 0.0
    %92 = vmatprep.subr.mxu0 0.0
    %93 = vmatpush2.msra.mxu0 0.0
    %94 = vmatprep.subr.mxu0 0.0
    %95 = vmatpush2.msra.mxu0 0.0
    %96 = vmatprep.subr.mxu0 0.0
    %97 = vmatpush2.msra.mxu0 0.0
    %98 = vmatprep.subr.mxu0 0.0
    %99 = vmatpush2.msra.mxu0 0.0
    %100 = vmatprep.subr.mxu0 0.0
    %101 = vmatpush2.msra.mxu0 0.0
    %102 = vmatprep.subr.mxu0 0.0
    %103 = vmatpush2.msra.mxu0 0.0
    %104 = vmatprep.subr.mxu0 0.0
    %105 = vmatpush2.msra.mxu0 0.0
    %106 = vmatprep.mubr.f32.mxu0 0.0
    %107 = vmatmul.mubr.f32.gmra.mxu0 %v40
    %v108 = vpop.f32.mrf.mxu0
    %v109 = vadd.f32 0.0, %v108
    %v110 = vpop.f32.mrf.mxu0
    %111 = vdwg.mxu0
    %v112 = vld [vmem:[%s2] sm:$0xff]
    %v113 = vld [vmem:[%s2 + $0x8] sm:$0xff]
    %v114 = vld [vmem:[%s2 + $0x10] sm:$0xff]
    %v115 = vld [vmem:[%s2 + $0x18] sm:$0xff]
    %v116 = vld [vmem:[%s2 + $0x20] sm:$0xff]
    %v117 = vld [vmem:[%s2 + $0x28] sm:$0xff]
    %118 = vset.pattern.permute.xlu0 1
    %119 = vperm.xlu0 %118, %v21
    %v120 = vpop.permute.xlu0 %119
    %vm121 = vcmp.eq.s32.totalorder %v120, %v31
    %v122 = vsel %vm121, 1, 0
    %v123 = vcvt.s32.f32 %v122
    %vm124 = vcmask 392192
    %v126 = vsel %vm124, %v123, 0
    %128 = vmatprep.subr.mxu0 0.0
    %129 = vmatpush1.msra.mxu0 0.0
    %130 = vmatprep.subr.mxu0 0.0
    %131 = vmatpush1.msra.mxu0 0.0
    %132 = vmatprep.subr.mxu0 0.0
    %133 = vmatpush1.msra.mxu0 0.0
    %134 = vmatprep.subr.mxu0 0.0
    %135 = vmatpush1.msra.mxu0 0.0
    %136 = vmatprep.subr.mxu0 0.0
    %137 = vmatpush1.msra.mxu0 0.0
    %138 = vmatprep.subr.mxu0 0.0
    %139 = vmatpush1.msra.mxu0 0.0
    %140 = vmatprep.subr.mxu0 0.0
    %141 = vmatpush1.msra.mxu0 0.0
    %142 = vmatprep.subr.mxu0 0.0
    %143 = vmatpush1.msra.mxu0 0.0
    %144 = vmatprep.subr.mxu0 0.0
    %145 = vmatpush1.msra.mxu0 0.0
    %146 = vmatprep.subr.mxu0 0.0
    %147 = vmatpush1.msra.mxu0 0.0
    %148 = vmatprep.subr.mxu0 0.0
    %149 = vmatpush1.msra.mxu0 %v117
    %150 = vmatprep.subr.mxu0 0.0
    %151 = vmatpush1.msra.mxu0 %v116
    %152 = vmatprep.subr.mxu0 0.0
    %153 = vmatpush1.msra.mxu0 %v115
    %154 = vmatprep.subr.mxu0 0.0
    %155 = vmatpush1.msra.mxu0 %v114
    %156 = vmatprep.subr.mxu0 0.0
    %157 = vmatpush1.msra.mxu0 %v113
    %158 = vmatprep.subr.mxu0 0.0
    %159 = vmatpush1.msra.mxu0 %v112
    %160 = vmatprep.subr.mxu0 0.0
    %161 = vmatpush2.msra.mxu0 0.0
    %162 = vmatprep.subr.mxu0 0.0
    %163 = vmatpush2.msra.mxu0 0.0
    %164 = vmatprep.subr.mxu0 0.0
    %165 = vmatpush2.msra.mxu0 0.0
    %166 = vmatprep.subr.mxu0 0.0
    %167 = vmatpush2.msra.mxu0 0.0
    %168 = vmatprep.subr.mxu0 0.0
    %169 = vmatpush2.msra.mxu0 0.0
    %170 = vmatprep.subr.mxu0 0.0
    %171 = vmatpush2.msra.mxu0 0.0
    %172 = vmatprep.subr.mxu0 0.0
    %173 = vmatpush2.msra.mxu0 0.0
    %174 = vmatprep.subr.mxu0 0.0
    %175 = vmatpush2.msra.mxu0 0.0
    %176 = vmatprep.subr.mxu0 0.0
    %177 = vmatpush2.msra.mxu0 0.0
    %178 = vmatprep.subr.mxu0 0.0
    %179 = vmatpush2.msra.mxu0 0.0
    %180 = vmatprep.subr.mxu0 0.0
    %181 = vmatpush2.msra.mxu0 0.0
    %182 = vmatprep.subr.mxu0 0.0
    %183 = vmatpush2.msra.mxu0 0.0
    %184 = vmatprep.subr.mxu0 0.0
    %185 = vmatpush2.msra.mxu0 0.0
    %186 = vmatprep.subr.mxu0 0.0
    %187 = vmatpush2.msra.mxu0 0.0
    %188 = vmatprep.subr.mxu0 0.0
    %189 = vmatpush2.msra.mxu0 0.0
    %190 = vmatprep.subr.mxu0 0.0
    %191 = vmatpush2.msra.mxu0 0.0
    %192 = vmatprep.mubr.f32.mxu0 0.0
    %193 = vmatmul.mubr.f32.gmra.mxu0 %v126
    %v194 = vpop.f32.mrf.mxu0
    %v195 = vadd.f32 0.0, %v194
    %v196 = vpop.f32.mrf.mxu0
    %197 = vdwg.mxu0
    %v198 = vld [vmem:[%s3] sm:$0xff]
    %v199 = vld [vmem:[%s3 + $0x8] sm:$0xff]
    %200 = vset.pattern.permute.xlu0 2
    %201 = vperm.xlu0 %200, %v21
    %v202 = vpop.permute.xlu0 %201
    %vm203 = vcmp.eq.s32.totalorder %v202, %v31
    %v204 = vsel %vm203, 1, 0
    %v205 = vcvt.s32.f32 %v204
    %vm206 = vcmask 130048
    %v208 = vsel %vm206, %v205, 0
    %210 = vmatprep.subr.mxu0 0.0
    %211 = vmatpush1.msra.mxu0 0.0
    %212 = vmatprep.subr.mxu0 0.0
    %213 = vmatpush1.msra.mxu0 0.0
    %214 = vmatprep.subr.mxu0 0.0
    %215 = vmatpush1.msra.mxu0 0.0
    %216 = vmatprep.subr.mxu0 0.0
    %217 = vmatpush1.msra.mxu0 0.0
    %218 = vmatprep.subr.mxu0 0.0
    %219 = vmatpush1.msra.mxu0 0.0
    %220 = vmatprep.subr.mxu0 0.0
    %221 = vmatpush1.msra.mxu0 0.0
    %222 = vmatprep.subr.mxu0 0.0
    %223 = vmatpush1.msra.mxu0 0.0
    %224 = vmatprep.subr.mxu0 0.0
    %225 = vmatpush1.msra.mxu0 0.0
    %226 = vmatprep.subr.mxu0 0.0
    %227 = vmatpush1.msra.mxu0 0.0
    %228 = vmatprep.subr.mxu0 0.0
    %229 = vmatpush1.msra.mxu0 0.0
    %230 = vmatprep.subr.mxu0 0.0
    %231 = vmatpush1.msra.mxu0 0.0
    %232 = vmatprep.subr.mxu0 0.0
    %233 = vmatpush1.msra.mxu0 0.0
    %234 = vmatprep.subr.mxu0 0.0
    %235 = vmatpush1.msra.mxu0 0.0
    %236 = vmatprep.subr.mxu0 0.0
    %237 = vmatpush1.msra.mxu0 0.0
    %238 = vmatprep.subr.mxu0 0.0
    %239 = vmatpush1.msra.mxu0 %v199
    %240 = vmatprep.subr.mxu0 0.0
    %241 = vmatpush1.msra.mxu0 %v198
    %242 = vmatprep.subr.mxu0 0.0
    %243 = vmatpush2.msra.mxu0 0.0
    %244 = vmatprep.subr.mxu0 0.0
    %245 = vmatpush2.msra.mxu0 0.0
    %246 = vmatprep.subr.mxu0 0.0
    %247 = vmatpush2.msra.mxu0 0.0
    %248 = vmatprep.subr.mxu0 0.0
    %249 = vmatpush2.msra.mxu0 0.0
    %250 = vmatprep.subr.mxu0 0.0
    %251 = vmatpush2.msra.mxu0 0.0
    %252 = vmatprep.subr.mxu0 0.0
    %253 = vmatpush2.msra.mxu0 0.0
    %254 = vmatprep.subr.mxu0 0.0
    %255 = vmatpush2.msra.mxu0 0.0
    %256 = vmatprep.subr.mxu0 0.0
    %257 = vmatpush2.msra.mxu0 0.0
    %258 = vmatprep.subr.mxu0 0.0
    %259 = vmatpush2.msra.mxu0 0.0
    %260 = vmatprep.subr.mxu0 0.0
    %261 = vmatpush2.msra.mxu0 0.0
    %262 = vmatprep.subr.mxu0 0.0
    %263 = vmatpush2.msra.mxu0 0.0
    %264 = vmatprep.subr.mxu0 0.0
    %265 = vmatpush2.msra.mxu0 0.0
    %266 = vmatprep.subr.mxu0 0.0
    %267 = vmatpush2.msra.mxu0 0.0
    %268 = vmatprep.subr.mxu0 0.0
    %269 = vmatpush2.msra.mxu0 0.0
    %270 = vmatprep.subr.mxu0 0.0
    %271 = vmatpush2.msra.mxu0 0.0
    %272 = vmatprep.subr.mxu0 0.0
    %273 = vmatpush2.msra.mxu0 0.0
    %274 = vmatprep.mubr.f32.mxu0 0.0
    %275 = vmatmul.mubr.f32.gmra.mxu0 %v208
    %v276 = vpop.f32.mrf.mxu0
    %v277 = vadd.f32 0.0, %v276
    %v278 = vpop.f32.mrf.mxu0
    %279 = vdwg.mxu0
    %v280 = vld [vmem:[%s4] sm:$0xff]
    %281 = vset.pattern.permute.xlu0 3
    %282 = vperm.xlu0 %281, %v21
    %v283 = vpop.permute.xlu0 %282
    %vm284 = vcmp.eq.s32.totalorder %v283, %v31
    %v285 = vsel %vm284, 1, 0
    %v286 = vcvt.s32.f32 %v285
    %vm287 = vcmask 64512
    %v289 = vsel %vm287, %v286, 0
    %291 = vmatprep.subr.mxu0 0.0
    %292 = vmatpush1.msra.mxu0 0.0
    %293 = vmatprep.subr.mxu0 0.0
    %294 = vmatpush1.msra.mxu0 0.0
    %295 = vmatprep.subr.mxu0 0.0
    %296 = vmatpush1.msra.mxu0 0.0
    %297 = vmatprep.subr.mxu0 0.0
    %298 = vmatpush1.msra.mxu0 0.0
    %299 = vmatprep.subr.mxu0 0.0
    %300 = vmatpush1.msra.mxu0 0.0
    %301 = vmatprep.subr.mxu0 0.0
    %302 = vmatpush1.msra.mxu0 0.0
    %303 = vmatprep.subr.mxu0 0.0
    %304 = vmatpush1.msra.mxu0 0.0
    %305 = vmatprep.subr.mxu0 0.0
    %306 = vmatpush1.msra.mxu0 0.0
    %307 = vmatprep.subr.mxu0 0.0
    %308 = vmatpush1.msra.mxu0 0.0
    %309 = vmatprep.subr.mxu0 0.0
    %310 = vmatpush1.msra.mxu0 0.0
    %311 = vmatprep.subr.mxu0 0.0
    %312 = vmatpush1.msra.mxu0 0.0
    %313 = vmatprep.subr.mxu0 0.0
    %314 = vmatpush1.msra.mxu0 0.0
    %315 = vmatprep.subr.mxu0 0.0
    %316 = vmatpush1.msra.mxu0 0.0
    %317 = vmatprep.subr.mxu0 0.0
    %318 = vmatpush1.msra.mxu0 0.0
    %319 = vmatprep.subr.mxu0 0.0
    %320 = vmatpush1.msra.mxu0 0.0
    %321 = vmatprep.subr.mxu0 0.0
    %322 = vmatpush1.msra.mxu0 %v280
    %323 = vmatprep.subr.mxu0 0.0
    %324 = vmatpush2.msra.mxu0 0.0
    %325 = vmatprep.subr.mxu0 0.0
    %326 = vmatpush2.msra.mxu0 0.0
    %327 = vmatprep.subr.mxu0 0.0
    %328 = vmatpush2.msra.mxu0 0.0
    %329 = vmatprep.subr.mxu0 0.0
    %330 = vmatpush2.msra.mxu0 0.0
    %331 = vmatprep.subr.mxu0 0.0
    %332 = vmatpush2.msra.mxu0 0.0
    %333 = vmatprep.subr.mxu0 0.0
    %334 = vmatpush2.msra.mxu0 0.0
    %335 = vmatprep.subr.mxu0 0.0
    %336 = vmatpush2.msra.mxu0 0.0
    %337 = vmatprep.subr.mxu0 0.0
    %338 = vmatpush2.msra.mxu0 0.0
    %339 = vmatprep.subr.mxu0 0.0
    %340 = vmatpush2.msra.mxu0 0.0
    %341 = vmatprep.subr.mxu0 0.0
    %342 = vmatpush2.msra.mxu0 0.0
    %343 = vmatprep.subr.mxu0 0.0
    %344 = vmatpush2.msra.mxu0 0.0
    %345 = vmatprep.subr.mxu0 0.0
    %346 = vmatpush2.msra.mxu0 0.0
    %347 = vmatprep.subr.mxu0 0.0
    %348 = vmatpush2.msra.mxu0 0.0
    %349 = vmatprep.subr.mxu0 0.0
    %350 = vmatpush2.msra.mxu0 0.0
    %351 = vmatprep.subr.mxu0 0.0
    %352 = vmatpush2.msra.mxu0 0.0
    %353 = vmatprep.subr.mxu0 0.0
    %354 = vmatpush2.msra.mxu0 0.0
    %355 = vmatprep.mubr.f32.mxu0 0.0
    %356 = vmatmul.mubr.f32.gmra.mxu0 %v289
    %v357 = vpop.f32.mrf.mxu0
    %v358 = vadd.f32 0.0, %v357
    %v359 = vpop.f32.mrf.mxu0
    %360 = vdwg.mxu0
    %362 = vrot.lane.b32.xlu0 %v195, 32
    %v363 = vpop.permute.xlu0 %362
    %366 = vrot.lane.b32.xlu0 %v277, 64
    %v367 = vpop.permute.xlu0 %366
    %370 = vrot.lane.b32.xlu0 %v358, 96
    %v371 = vpop.permute.xlu0 %370
    %vm373 = vcmask 261120
    %v374 = vsel %vm373, %v109, %v363
    %v375 = vsel %vm38, %v374, %v367
    %vm376 = vcmask 785408
    %v377 = vsel %vm376, %v375, %v371
    %378 = vst [vmem:[#allocation2] sm:$0xff] %v377
    // Predicated region
    $region22: #{tpu_custom_call.1} parent=1 // pred_check
      _
    $region23: #{tpu_custom_call.1} parent=1 // pred_check_branch
      %380 = sbr.rel (0) target = $region25
    $region24: #{tpu_custom_call.1} parent=1 // pred_region
      %s382 = ssub.s32 128, 128
      %383 = vsyncadd [#allocation3], %s382
      %s385 = sshll.u32 [#allocation2], 4
      %s386 = int_to_ptr.vmem [resolvable:$true] %s385
      %388 = dma.vmem_to_hbm [thread:$0]  %s386, 128, %s5, [#allocation3]
    $region25: #{tpu_custom_call.1} parent=1 // pred_fallthru
      _
    // Predicated region
    $region26: #{tpu_custom_call.1} parent=1 // pred_check
      _
    $region27: #{tpu_custom_call.1} parent=1 // pred_check_branch
      %390 = sbr.rel (0) target = $region29
    $region28: #{tpu_custom_call.1} parent=1 // pred_region
      %391 = dma.done [#allocation3], 128
    $region29: #{tpu_custom_call.1} parent=1 // pred_fallthru
      _
    %392 = vsyncpa [#allocation3], 1

</llo_original>
